<compile_context>
chip_gen: v7x
topology: tpu7x:2x2x1
jax: 0.10.0
libtpu: 0.0.40
codegen_flags: <defaults>
</compile_context>

<pallas_src>
import functools
import math

import jax
import jax.numpy as jnp
from jax.experimental import pallas as pl
from jax.experimental.pallas import tpu as pltpu


def _round_up(x, m):
    return ((x + m - 1) // m) * m


def _fused_mlp_kernel(*refs, num_layers, activations, compute_dtype):
    # refs = (x_ref, w1, b1, w2, b2, ..., wN, bN, o_ref)
    x_ref = refs[0]
    w_refs = refs[1:1 + 2 * num_layers:2]
    b_refs = refs[2:2 + 2 * num_layers:2]
    o_ref = refs[1 + 2 * num_layers]

    h = x_ref[...].astype(jnp.float32)            # (TM, K) rows of this tile
    for i in range(num_layers):
        # MXU matmul in compute_dtype (bf16 by default) with f32 accumulation.
        y = jnp.dot(h.astype(compute_dtype), w_refs[i][...],
                    preferred_element_type=jnp.float32)
        # Bias add / activations in f32 on the VPU (v5e has no bf16 VPU).
        y = y + b_refs[i][...].astype(jnp.float32)
        act = activations[i]
        if act == "relu":
            y = jnp.maximum(y, 0.0)
        elif act == "sigmoid":
            # Single EUP transcendental: sigmoid(y) = 0.5 * tanh(y/2) + 0.5.
            y = 0.5 * jnp.tanh(0.5 * y) + 0.5
        h = y
    o_ref[...] = h.astype(o_ref.dtype)


def prepare_mlp_params(params, compute_dtype=jnp.bfloat16):
    """One-time parameter preparation (call OUTSIDE the per-step forward).

    * Weights are cast (explicitly) to `compute_dtype`; biases kept in f32.
    * Only internal (hidden) layer boundaries are zero-padded to multiples of
      128 so intermediate activations are lane-dense.  The input dim (must
      match x) and the final output dim (avoid write amplification) stay
      unpadded.  Zero padding is semantically inert: zero activations hit zero
      weight rows, zero bias, relu(0) = 0.
    """
    num_layers = len(params)
    dims = [params[0][0].shape[0]] + [w.shape[1] for w, _ in params]
    pdims = list(dims)
    for i in range(1, num_layers):                # internal boundaries only
        pdims[i] = _round_up(dims[i], 128)
    prepped = []
    for li, (w, b) in enumerate(params):
        kin, kout = w.shape
        pin, pout = pdims[li], pdims[li + 1]
        wp = jnp.zeros((pin, pout), compute_dtype)
        wp = wp.at[:kin, :kout].set(jnp.asarray(w, compute_dtype))
        bp = jnp.zeros((1, pout), jnp.float32)
        bp = bp.at[:, :kout].set(jnp.asarray(b, jnp.float32).reshape(1, -1))
        prepped.append((wp, bp))
    return tuple(prepped)


def mlp_forward(x, prepped_params, sigmoid_output=False, tile_m=512):
    """x: (..., input_dim) -> (..., output_dim). Single fused Pallas kernel."""
    num_layers = len(prepped_params)
    lead_shape = x.shape[:-1]
    x2d = x.reshape(-1, x.shape[-1])
    M, K = x2d.shape
    assert prepped_params[0][0].shape[0] == K, "input_dim mismatch"
    out_dim = prepped_params[-1][0].shape[1]
    out_dtype = x2d.dtype
    compute_dtype = prepped_params[0][0].dtype
    itemsize = jnp.dtype(out_dtype).itemsize

    # Row tiling: last block may be partial (masked store), so M is never
    # padded.  Shrink the tile when M is small so the grid has >= 2 steps and
    # v7x's second TensorCore is not idle.
    m8 = _round_up(M, 8)
    tm = min(_round_up(tile_m, 8), m8)
    if m8 > 8 and pl.cdiv(M, tm) < 2:
        tm = _round_up(pl.cdiv(m8, 2), 8)
    grid = (pl.cdiv(M, tm),)

    # x and out blocks follow the row grid; feature dims use the full array
    # dim (legal under the (8,128) rule's "equals full dim" escape), so no
    # lane-padding copies are needed in the wrapper.
    in_specs = [pl.BlockSpec((tm, K), lambda i: (i, 0))]
    flat_params = []
    for w, b in prepped_params:
        flat_params += [w, b]
        # Constant index_map -> fetched once, VMEM-resident across the grid.
        in_specs += [pl.BlockSpec(w.shape, lambda i: (0, 0)),
                     pl.BlockSpec(b.shape, lambda i: (0, 0))]
    out_specs = pl.BlockSpec((tm, out_dim), lambda i: (i, 0))

    activations = tuple(
        "relu" if i < num_layers - 1 else ("sigmoid" if sigmoid_output else "none")
        for i in range(num_layers))
    kernel = functools.partial(
        _fused_mlp_kernel, num_layers=num_layers, activations=activations,
        compute_dtype=compute_dtype)

    # Advisory cost estimate so XLA can schedule surrounding work around it.
    param_bytes = sum(w.size * jnp.dtype(w.dtype).itemsize
                      + b.size * jnp.dtype(b.dtype).itemsize
                      for w, b in prepped_params)
    cost = pl.CostEstimate(
        flops=2 * M * sum(w.shape[0] * w.shape[1] for w, _ in prepped_params),
        transcendentals=M * out_dim if sigmoid_output else 0,
        bytes_accessed=M * K * itemsize + param_bytes + M * out_dim * itemsize)

    # VMEM budget: double-buffered x/out tiles + (double-buffered) resident
    # weights + f32 intermediates; 2x margin, capped below v7x's 64 MiB.
    max_feat = max([K, out_dim] + [w.shape[1] for w, _ in prepped_params])
    vmem_needed = (2 * tm * (K + out_dim) * itemsize
                   + 2 * param_bytes
                   + 2 * tm * max_feat * 4)
    vmem_limit = int(min(max(2 * vmem_needed, 32 * 1024 * 1024),
                         56 * 1024 * 1024))

    out2d = pl.pallas_call(
        kernel,
        out_shape=jax.ShapeDtypeStruct((M, out_dim), out_dtype),
        grid=grid,
        in_specs=in_specs,
        out_specs=out_specs,
        compiler_params=pltpu.CompilerParams(
            dimension_semantics=("parallel",),
            vmem_limit_bytes=vmem_limit),
        cost_estimate=cost,
    )(x2d, *flat_params)

    return out2d.reshape(*lead_shape, out_dim)


def init_mlp_params(key, input_dim, hidden_dim, output_dim, num_layers,
                    dtype=jnp.float32):
    """nn.Linear-style init: uniform(-1/sqrt(fan_in), 1/sqrt(fan_in))."""
    h = [hidden_dim] * (num_layers - 1)
    dims_in = [input_dim] + h
    dims_out = h + [output_dim]
    params = []
    for n_in, n_out in zip(dims_in, dims_out):
        key, kw, kb = jax.random.split(key, 3)
        bound = 1.0 / math.sqrt(n_in)
        w = jax.random.uniform(kw, (n_in, n_out), dtype, -bound, bound)
        b = jax.random.uniform(kb, (n_out,), dtype, -bound, bound)
        params.append((w, b))
    return params


def _reference_forward(x, params, sigmoid_output=False):
    num_layers = len(params)
    y = x
    for i, (w, b) in enumerate(params):
        y = y @ w + b
        if i < num_layers - 1:
            y = jnp.maximum(y, 0.0)
    if sigmoid_output:
        y = 1.0 / (1.0 + jnp.exp(-y))
    return y


if __name__ == "__main__":
    key = jax.random.PRNGKey(0)
    k_in, k_par = jax.random.split(key)

    # Small shapes consistent with mask-decoder MLP usage:
    # (batch, tokens, input_dim) -> (batch, tokens, output_dim)
    batch, tokens = 2, 8
    input_dim, hidden_dim, output_dim, num_layers = 32, 32, 4, 3
    sigmoid_output = True

    x = jax.random.normal(k_in, (batch, tokens, input_dim), jnp.float32)
    params = init_mlp_params(k_par, input_dim, hidden_dim, output_dim, num_layers)
    ref = _reference_forward(x, params, sigmoid_output=sigmoid_output)

    # f32 compute path (MXU precision applies to the matmuls -> modest tol).
    prepped_f32 = prepare_mlp_params(params, compute_dtype=jnp.float32)
    out_f32 = jax.block_until_ready(
        mlp_forward(x, prepped_f32, sigmoid_output=sigmoid_output))
    assert out_f32.shape == (batch, tokens, output_dim)
    assert bool(jnp.all(jnp.isfinite(out_f32)))
    assert jnp.allclose(out_f32, ref, atol=2e-2, rtol=2e-2)

    # Default bf16-MXU path (f32 accumulation) — looser tolerance.
    prepped_bf16 = prepare_mlp_params(params)          # bf16 weights
    out_bf16 = jax.block_until_ready(
        mlp_forward(x, prepped_bf16, sigmoid_output=sigmoid_output))
    assert out_bf16.shape == (batch, tokens, output_dim)
    assert jnp.allclose(out_bf16, ref, atol=4e-2, rtol=4e-2)

    print("KERNEL_OK")
</pallas_src>

<mosaic_0001>
module attributes {stable_mosaic.version = 11 : i64} {
  func.func @_fused_mlp_kernel(%arg0: i32, %arg1: memref<8x32xf32, #tpu.memory_space<vmem>>, %arg2: memref<32x128xf32, #tpu.memory_space<vmem>>, %arg3: memref<1x128xf32, #tpu.memory_space<vmem>>, %arg4: memref<128x128xf32, #tpu.memory_space<vmem>>, %arg5: memref<1x128xf32, #tpu.memory_space<vmem>>, %arg6: memref<128x4xf32, #tpu.memory_space<vmem>>, %arg7: memref<1x4xf32, #tpu.memory_space<vmem>>, %arg8: memref<8x4xf32, #tpu.memory_space<vmem>>) attributes {dimension_semantics = [#tpu.dimension_semantics<parallel>], iteration_bounds = array<i64: 2>, scalar_prefetch = 0 : i64, scratch_operands = 0 : i64, tpu.core_type = #tpu.core_type<tc>, window_params = [{transform_indices = @transform_0, window_bounds = array<i64: 8, 32>}, {pipeline_mode = #tpu.pipeline_mode<synchronous>, transform_indices = @transform_1, window_bounds = array<i64: 32, 128>}, {pipeline_mode = #tpu.pipeline_mode<synchronous>, transform_indices = @transform_2, window_bounds = array<i64: 1, 128>}, {pipeline_mode = #tpu.pipeline_mode<synchronous>, transform_indices = @transform_3, window_bounds = array<i64: 128, 128>}, {pipeline_mode = #tpu.pipeline_mode<synchronous>, transform_indices = @transform_4, window_bounds = array<i64: 1, 128>}, {pipeline_mode = #tpu.pipeline_mode<synchronous>, transform_indices = @transform_5, window_bounds = array<i64: 128, 4>}, {pipeline_mode = #tpu.pipeline_mode<synchronous>, transform_indices = @transform_6, window_bounds = array<i64: 1, 4>}, {transform_indices = @transform_7, window_bounds = array<i64: 8, 4>}]} {
    %c0 = arith.constant 0 : index
    %c0_0 = arith.constant 0 : index
    %0 = vector.load %arg1[%c0, %c0_0] : memref<8x32xf32, #tpu.memory_space<vmem>>, vector<8x32xf32>
    %c0_1 = arith.constant 0 : index
    %c0_2 = arith.constant 0 : index
    %1 = vector.load %arg2[%c0_1, %c0_2] : memref<32x128xf32, #tpu.memory_space<vmem>>, vector<32x128xf32>
    %cst = arith.constant dense<0.000000e+00> : vector<8x128xf32>
    %2 = tpu.matmul %0, %1, %cst {dimension_numbers = #tpu.dot_dimension_numbers<[1], [0], [0], [1], [0, 0, 1, 1], [], []>} : vector<8x32xf32>, vector<32x128xf32>, vector<8x128xf32> -> vector<8x128xf32>
    %c0_3 = arith.constant 0 : index
    %c0_4 = arith.constant 0 : index
    %3 = vector.load %arg3[%c0_3, %c0_4] : memref<1x128xf32, #tpu.memory_space<vmem>>, vector<1x128xf32>
    %4 = vector.broadcast %3 : vector<1x128xf32> to vector<8x128xf32>
    %5 = arith.addf %2, %4 : vector<8x128xf32>
    %cst_5 = arith.constant 0.000000e+00 : f32
    %6 = vector.broadcast %cst_5 : f32 to vector<8x128xf32>
    %7 = arith.maximumf %5, %6 : vector<8x128xf32>
    %c0_6 = arith.constant 0 : index
    %c0_7 = arith.constant 0 : index
    %8 = vector.load %arg4[%c0_6, %c0_7] : memref<128x128xf32, #tpu.memory_space<vmem>>, vector<128x128xf32>
    %cst_8 = arith.constant dense<0.000000e+00> : vector<8x128xf32>
    %9 = tpu.matmul %7, %8, %cst_8 {dimension_numbers = #tpu.dot_dimension_numbers<[1], [0], [0], [1], [0, 0, 1, 1], [], []>} : vector<8x128xf32>, vector<128x128xf32>, vector<8x128xf32> -> vector<8x128xf32>
    %c0_9 = arith.constant 0 : index
    %c0_10 = arith.constant 0 : index
    %10 = vector.load %arg5[%c0_9, %c0_10] : memref<1x128xf32, #tpu.memory_space<vmem>>, vector<1x128xf32>
    %11 = vector.broadcast %10 : vector<1x128xf32> to vector<8x128xf32>
    %12 = arith.addf %9, %11 : vector<8x128xf32>
    %cst_11 = arith.constant 0.000000e+00 : f32
    %13 = vector.broadcast %cst_11 : f32 to vector<8x128xf32>
    %14 = arith.maximumf %12, %13 : vector<8x128xf32>
    %c0_12 = arith.constant 0 : index
    %c0_13 = arith.constant 0 : index
    %15 = vector.load %arg6[%c0_12, %c0_13] : memref<128x4xf32, #tpu.memory_space<vmem>>, vector<128x4xf32>
    %cst_14 = arith.constant dense<0.000000e+00> : vector<8x4xf32>
    %16 = tpu.matmul %14, %15, %cst_14 {dimension_numbers = #tpu.dot_dimension_numbers<[1], [0], [0], [1], [0, 0, 1, 1], [], []>} : vector<8x128xf32>, vector<128x4xf32>, vector<8x4xf32> -> vector<8x4xf32>
    %c0_15 = arith.constant 0 : index
    %c0_16 = arith.constant 0 : index
    %17 = vector.load %arg7[%c0_15, %c0_16] : memref<1x4xf32, #tpu.memory_space<vmem>>, vector<1x4xf32>
    %18 = vector.broadcast %17 : vector<1x4xf32> to vector<8x4xf32>
    %19 = arith.addf %16, %18 : vector<8x4xf32>
    %cst_17 = arith.constant 5.000000e-01 : f32
    %20 = vector.broadcast %cst_17 : f32 to vector<8x4xf32>
    %21 = arith.mulf %20, %19 : vector<8x4xf32>
    %22 = math.tanh %21 : vector<8x4xf32>
    %cst_18 = arith.constant 5.000000e-01 : f32
    %23 = vector.broadcast %cst_18 : f32 to vector<8x4xf32>
    %24 = arith.mulf %23, %22 : vector<8x4xf32>
    %cst_19 = arith.constant 5.000000e-01 : f32
    %25 = vector.broadcast %cst_19 : f32 to vector<8x4xf32>
    %26 = arith.addf %24, %25 : vector<8x4xf32>
    %c0_20 = arith.constant 0 : index
    %c0_21 = arith.constant 0 : index
    %27 = vector.load %arg8[%c0_20, %c0_21] : memref<8x4xf32, #tpu.memory_space<vmem>>, vector<8x4xf32>
    tpu.vector_store %arg8[%c0_20, %c0_21], %26 {strides = array<i32>} : memref<8x4xf32, #tpu.memory_space<vmem>>, vector<8x4xf32>,
    return
  }
  func.func @transform_0(%arg0: i32) -> (i32, i32) {
    %c0_i32 = arith.constant 0 : i32
    %c0_i32_0 = arith.constant 0 : i32
    return %arg0, %c0_i32 : i32, i32
  }
  func.func @transform_1(%arg0: i32) -> (i32, i32) {
    %c0_i32 = arith.constant 0 : i32
    %c0_i32_0 = arith.constant 0 : i32
    %c0_i32_1 = arith.constant 0 : i32
    return %c0_i32, %c0_i32_0 : i32, i32
  }
  func.func @transform_2(%arg0: i32) -> (i32, i32) {
    %c0_i32 = arith.constant 0 : i32
    %c0_i32_0 = arith.constant 0 : i32
    %c0_i32_1 = arith.constant 0 : i32
    return %c0_i32, %c0_i32_0 : i32, i32
  }
  func.func @transform_3(%arg0: i32) -> (i32, i32) {
    %c0_i32 = arith.constant 0 : i32
    %c0_i32_0 = arith.constant 0 : i32
    %c0_i32_1 = arith.constant 0 : i32
    return %c0_i32, %c0_i32_0 : i32, i32
  }
  func.func @transform_4(%arg0: i32) -> (i32, i32) {
    %c0_i32 = arith.constant 0 : i32
    %c0_i32_0 = arith.constant 0 : i32
    %c0_i32_1 = arith.constant 0 : i32
    return %c0_i32, %c0_i32_0 : i32, i32
  }
  func.func @transform_5(%arg0: i32) -> (i32, i32) {
    %c0_i32 = arith.constant 0 : i32
    %c0_i32_0 = arith.constant 0 : i32
    %c0_i32_1 = arith.constant 0 : i32
    return %c0_i32, %c0_i32_0 : i32, i32
  }
  func.func @transform_6(%arg0: i32) -> (i32, i32) {
    %c0_i32 = arith.constant 0 : i32
    %c0_i32_0 = arith.constant 0 : i32
    %c0_i32_1 = arith.constant 0 : i32
    return %c0_i32, %c0_i32_0 : i32, i32
  }
  func.func @transform_7(%arg0: i32) -> (i32, i32) {
    %c0_i32 = arith.constant 0 : i32
    %c0_i32_0 = arith.constant 0 : i32
    return %arg0, %c0_i32 : i32, i32
  }
}

</mosaic_0001>

<llo_original>
// kernel: tpu_custom_call.1
$region0: #{tpu_custom_call.1}
  #allocation0 [shape = 'u32[]', space=smem, size = 0x4, offset = 0x4, fixed_abs, tag = 'smem constant byte address 0x4 - core index']
  #allocation1 [shape = 'u32[144,128]{1,0:T(1,128)}', space=vmem, size = 0x12000, scoped, tag = 'internal scratch']
  %s0 = inlined_call_operand.hbm [shape: f32[16,32], index: 0, kind: input, shape index: {}]
  %s1 = inlined_call_operand.hbm [shape: f32[32,128], index: 1, kind: input, shape index: {}]
  %s2 = inlined_call_operand.vmem [shape: f32[1,128], index: 2, kind: input, shape index: {}]
  %s3 = inlined_call_operand.vmem [shape: f32[128,128], index: 3, kind: input, shape index: {}]
  %s4 = inlined_call_operand.vmem [shape: f32[1,128], index: 4, kind: input, shape index: {}]
  %s5 = inlined_call_operand.vmem [shape: f32[128,4], index: 5, kind: input, shape index: {}]
  %s6 = inlined_call_operand.vmem [shape: f32[1,4], index: 6, kind: input, shape index: {}]
  %s7 = inlined_call_operand.vmem [shape: f32[16,4], index: 7, kind: output, shape index: {}]
  %s8 = sld [smem:[#allocation0]]
  $region69: #{tpu_custom_call.1} parent=0
    _
  %s10 = ssub.s32 1, %s8
  %s11 = scalar_select 0, %s10, %s8
  $region1: #{tpu_custom_call.1} parent=0
    #allocation2 [shape = 'u8[8192]{0}', space=vmem, size = 0x2000, scoped, tag = 'input window, operand 0']
    #allocation3 [shape = 's32[2]{0}', space=sflag, size = 0x8, scoped, tag = 'scoped memory for tpu_custom_call.1']
    #allocation4 [shape = 'u8[16384]{0}', space=vmem, size = 0x4000, scoped, tag = 'input window, operand 1, single buffered']
    #allocation5 [shape = 's32[1]{0}', space=sflag, size = 0x4, scoped, tag = 'scoped memory for tpu_custom_call.1']
    %12 = vsyncpa [#allocation3], 0
    %s13 = scalar_lea.sflag [#allocation3], 1
    %14 = vsyncpa %s13, 0
    %15 = vsyncpa [#allocation5], 0
    loop: start=0, step=1, limit=4
    $region2: #{tpu_custom_call.1} parent=1 // loop_pre_header
      _
    $region3: #{tpu_custom_call.1} parent=1 // loop_header
      %s17 = sphi 0, %s21
      %p18 = scmp.ge.s32.totalorder %s17, 4
      %s27 = sphi 0, %s29
      %s30 = sphi 0, %s27
      %s31 = sphi 0, %s30
      %s47 = sphi 0, %s31
      %s51 = sphi 0, %s51
      %s53 = sphi 0, %s51
      %s54 = sphi 0, %s53
      %s68 = sphi 0, %s54
      %s72 = sphi 0, %s72
      %s74 = sphi 0, %s72
      %s75 = sphi 0, %s74
      %s89 = sphi 0, %s75
      %s93 = sphi 0, %s93
      %s95 = sphi 0, %s93
      %s96 = sphi 0, %s95
      %s110 = sphi 0, %s96
      %s114 = sphi 0, %s114
      %s116 = sphi 0, %s114
      %s117 = sphi 0, %s116
      %s131 = sphi 0, %s117
      %s135 = sphi 0, %s135
      %s137 = sphi 0, %s135
      %s138 = sphi 0, %s137
      %s152 = sphi 0, %s138
      %s156 = sphi 0, %s156
      %s158 = sphi 0, %s156
      %s159 = sphi 0, %s158
      %s173 = sphi 0, %s159
      %s179 = sphi 0, %s181
      %s182 = sphi 0, %s179
      %s183 = sphi 0, %s182
      %s199 = sphi 0, %s183
    $region4: #{tpu_custom_call.1} parent=1 // loop_header_branch
      %20 = sbr.rel (%p18) target = $region8
    $region5: #{tpu_custom_call.1} parent=1 // loop_body
      %s22 = ssub.s32 %s17, 1
      %s23 = ssub.s32 %s17, 2
      %s24 = sadd.s32 %s17, 1
      %s25 = ssub.s32 %s17, %s24
      %p26 = scmp.eq.s32.totalorder %s25, 0
      %s28 = sadd.s32 %s27, 1
      %s29 = scalar_select %p26, %s27, %s28
      %p32 = pneg %p26
      %p33 = scmp.eq.s32.totalorder %s17, 1
      %p34 = por %p32, %p33
      %p35 = scmp.ne.s32.totalorder %s27, %s30
      %p36 = scmp.eq.s32.totalorder %s17, 0
      %p37 = por %p35, %p36
      %p38 = scmp.ne.s32.totalorder %s27, %s30
      %p39 = scmp.eq.s32.totalorder %s22, 1
      %p40 = por %p38, %p39
      %p41 = scmp.ne.s32.totalorder %s30, %s31
      %p42 = scmp.eq.s32.totalorder %s22, 0
      %p43 = por %p41, %p42
      %p44 = scmp.ne.s32.totalorder %s30, %s31
      %p45 = scmp.eq.s32.totalorder %s23, 1
      %p46 = por %p44, %p45
      %p48 = scmp.ne.s32.totalorder %s31, %s47
      %p49 = scmp.eq.s32.totalorder %s23, 0
      %p50 = por %p48, %p49
      %s52 = sadd.s32 %s51, 1
      %p55 = scmp.eq.s32.totalorder %s17, 1
      %p56 = scmp.ne.s32.totalorder %s51, %s53
      %p57 = scmp.eq.s32.totalorder %s17, 0
      %p58 = por %p56, %p57
      %p59 = scmp.ne.s32.totalorder %s51, %s53
      %p60 = scmp.eq.s32.totalorder %s22, 1
      %p61 = por %p59, %p60
      %p62 = scmp.ne.s32.totalorder %s53, %s54
      %p63 = scmp.eq.s32.totalorder %s22, 0
      %p64 = por %p62, %p63
      %p65 = scmp.ne.s32.totalorder %s53, %s54
      %p66 = scmp.eq.s32.totalorder %s23, 1
      %p67 = por %p65, %p66
      %p69 = scmp.ne.s32.totalorder %s54, %s68
      %p70 = scmp.eq.s32.totalorder %s23, 0
      %p71 = por %p69, %p70
      %s73 = sadd.s32 %s72, 1
      %p76 = scmp.eq.s32.totalorder %s17, 1
      %p77 = scmp.ne.s32.totalorder %s72, %s74
      %p78 = scmp.eq.s32.totalorder %s17, 0
      %p79 = por %p77, %p78
      %p80 = scmp.ne.s32.totalorder %s72, %s74
      %p81 = scmp.eq.s32.totalorder %s22, 1
      %p82 = por %p80, %p81
      %p83 = scmp.ne.s32.totalorder %s74, %s75
      %p84 = scmp.eq.s32.totalorder %s22, 0
      %p85 = por %p83, %p84
      %p86 = scmp.ne.s32.totalorder %s74, %s75
      %p87 = scmp.eq.s32.totalorder %s23, 1
      %p88 = por %p86, %p87
      %p90 = scmp.ne.s32.totalorder %s75, %s89
      %p91 = scmp.eq.s32.totalorder %s23, 0
      %p92 = por %p90, %p91
      %s94 = sadd.s32 %s93, 1
      %p97 = scmp.eq.s32.totalorder %s17, 1
      %p98 = scmp.ne.s32.totalorder %s93, %s95
      %p99 = scmp.eq.s32.totalorder %s17, 0
      %p100 = por %p98, %p99
      %p101 = scmp.ne.s32.totalorder %s93, %s95
      %p102 = scmp.eq.s32.totalorder %s22, 1
      %p103 = por %p101, %p102
      %p104 = scmp.ne.s32.totalorder %s95, %s96
      %p105 = scmp.eq.s32.totalorder %s22, 0
      %p106 = por %p104, %p105
      %p107 = scmp.ne.s32.totalorder %s95, %s96
      %p108 = scmp.eq.s32.totalorder %s23, 1
      %p109 = por %p107, %p108
      %p111 = scmp.ne.s32.totalorder %s96, %s110
      %p112 = scmp.eq.s32.totalorder %s23, 0
      %p113 = por %p111, %p112
      %s115 = sadd.s32 %s114, 1
      %p118 = scmp.eq.s32.totalorder %s17, 1
      %p119 = scmp.ne.s32.totalorder %s114, %s116
      %p120 = scmp.eq.s32.totalorder %s17, 0
      %p121 = por %p119, %p120
      %p122 = scmp.ne.s32.totalorder %s114, %s116
      %p123 = scmp.eq.s32.totalorder %s22, 1
      %p124 = por %p122, %p123
      %p125 = scmp.ne.s32.totalorder %s116, %s117
      %p126 = scmp.eq.s32.totalorder %s22, 0
      %p127 = por %p125, %p126
      %p128 = scmp.ne.s32.totalorder %s116, %s117
      %p129 = scmp.eq.s32.totalorder %s23, 1
      %p130 = por %p128, %p129
      %p132 = scmp.ne.s32.totalorder %s117, %s131
      %p133 = scmp.eq.s32.totalorder %s23, 0
      %p134 = por %p132, %p133
      %s136 = sadd.s32 %s135, 1
      %p139 = scmp.eq.s32.totalorder %s17, 1
      %p140 = scmp.ne.s32.totalorder %s135, %s137
      %p141 = scmp.eq.s32.totalorder %s17, 0
      %p142 = por %p140, %p141
      %p143 = scmp.ne.s32.totalorder %s135, %s137
      %p144 = scmp.eq.s32.totalorder %s22, 1
      %p145 = por %p143, %p144
      %p146 = scmp.ne.s32.totalorder %s137, %s138
      %p147 = scmp.eq.s32.totalorder %s22, 0
      %p148 = por %p146, %p147
      %p149 = scmp.ne.s32.totalorder %s137, %s138
      %p150 = scmp.eq.s32.totalorder %s23, 1
      %p151 = por %p149, %p150
      %p153 = scmp.ne.s32.totalorder %s138, %s152
      %p154 = scmp.eq.s32.totalorder %s23, 0
      %p155 = por %p153, %p154
      %s157 = sadd.s32 %s156, 1
      %p160 = scmp.eq.s32.totalorder %s17, 1
      %p161 = scmp.ne.s32.totalorder %s156, %s158
      %p162 = scmp.eq.s32.totalorder %s17, 0
      %p163 = por %p161, %p162
      %p164 = scmp.ne.s32.totalorder %s156, %s158
      %p165 = scmp.eq.s32.totalorder %s22, 1
      %p166 = por %p164, %p165
      %p167 = scmp.ne.s32.totalorder %s158, %s159
      %p168 = scmp.eq.s32.totalorder %s22, 0
      %p169 = por %p167, %p168
      %p170 = scmp.ne.s32.totalorder %s158, %s159
      %p171 = scmp.eq.s32.totalorder %s23, 1
      %p172 = por %p170, %p171
      %p174 = scmp.ne.s32.totalorder %s159, %s173
      %p175 = scmp.eq.s32.totalorder %s23, 0
      %p176 = por %p174, %p175
      %s177 = ssub.s32 %s17, %s24
      %p178 = scmp.eq.s32.totalorder %s177, 0
      %s180 = sadd.s32 %s179, 1
      %s181 = scalar_select %p178, %s179, %s180
      %p184 = pneg %p178
      %p185 = scmp.eq.s32.totalorder %s17, 1
      %p186 = por %p184, %p185
      %p187 = scmp.ne.s32.totalorder %s179, %s182
      %p188 = scmp.eq.s32.totalorder %s17, 0
      %p189 = por %p187, %p188
      %p190 = scmp.ne.s32.totalorder %s179, %s182
      %p191 = scmp.eq.s32.totalorder %s22, 1
      %p192 = por %p190, %p191
      %p193 = scmp.ne.s32.totalorder %s182, %s183
      %p194 = scmp.eq.s32.totalorder %s22, 0
      %p195 = por %p193, %p194
      %p196 = scmp.ne.s32.totalorder %s182, %s183
      %p197 = scmp.eq.s32.totalorder %s23, 1
      %p198 = por %p196, %p197
      %p200 = scmp.ne.s32.totalorder %s183, %s199
      %p201 = scmp.eq.s32.totalorder %s23, 0
      %p202 = por %p200, %p201
      %p203 = scmp.le.s32.totalorder 1, %s17
      %p204 = scmp.lt.s32.totalorder %s17, 3
      %p205 = pnand %p203, %p204
      %p206 = pneg %p205
      // Predicated region
      $region9: #{tpu_custom_call.1} parent=5 // pred_check
        _
      $region10: #{tpu_custom_call.1} parent=5 // pred_check_branch
        %208 = sbr.rel (%p205) target = $region12
      $region11: #{tpu_custom_call.1} parent=5 // pred_region
        %s209 = ssub.s32 %s17, 1
        // Predicated region
        $region13: #{tpu_custom_call.1} parent=11 // pred_check
          %p210 = pneg %p64
        $region14: #{tpu_custom_call.1} parent=11 // pred_check_branch
          %212 = sbr.rel (%p210) target = $region16
        $region15: #{tpu_custom_call.1} parent=11 // pred_region
          %s214 = ssub.s32 512, 512
          %215 = vsyncadd [#allocation5], %s214
          %s216 = sshll.u32 [#allocation4], 4
          %s217 = int_to_ptr.vmem [resolvable:$true] %s216
          %222 = dma.hbm_to_vmem [thread:$0]  %s1, 512, %s217, [#allocation5], 128, 128, 8
        $region16: #{tpu_custom_call.1} parent=11 // pred_fallthru
          _
        // Predicated region
        $region17: #{tpu_custom_call.1} parent=11 // pred_check
          %p223 = pneg %p85
        $region18: #{tpu_custom_call.1} parent=11 // pred_check_branch
          %225 = sbr.rel (%p223) target = $region20
        $region19: #{tpu_custom_call.1} parent=11 // pred_region
          _
        $region20: #{tpu_custom_call.1} parent=11 // pred_fallthru
          _
        // Predicated region
        $region21: #{tpu_custom_call.1} parent=11 // pred_check
          %p226 = pneg %p106
        $region22: #{tpu_custom_call.1} parent=11 // pred_check_branch
          %228 = sbr.rel (%p226) target = $region24
        $region23: #{tpu_custom_call.1} parent=11 // pred_region
          _
        $region24: #{tpu_custom_call.1} parent=11 // pred_fallthru
          _
        // Predicated region
        $region25: #{tpu_custom_call.1} parent=11 // pred_check
          %p229 = pneg %p127
        $region26: #{tpu_custom_call.1} parent=11 // pred_check_branch
          %231 = sbr.rel (%p229) target = $region28
        $region27: #{tpu_custom_call.1} parent=11 // pred_region
          _
        $region28: #{tpu_custom_call.1} parent=11 // pred_fallthru
          _
        // Predicated region
        $region29: #{tpu_custom_call.1} parent=11 // pred_check
          %p232 = pneg %p148
        $region30: #{tpu_custom_call.1} parent=11 // pred_check_branch
          %234 = sbr.rel (%p232) target = $region32
        $region31: #{tpu_custom_call.1} parent=11 // pred_region
          _
        $region32: #{tpu_custom_call.1} parent=11 // pred_fallthru
          _
        // Predicated region
        $region33: #{tpu_custom_call.1} parent=11 // pred_check
          %p235 = pneg %p169
        $region34: #{tpu_custom_call.1} parent=11 // pred_check_branch
          %237 = sbr.rel (%p235) target = $region36
        $region35: #{tpu_custom_call.1} parent=11 // pred_region
          _
        $region36: #{tpu_custom_call.1} parent=11 // pred_fallthru
          _
      $region12: #{tpu_custom_call.1} parent=5 // pred_fallthru
        _
      %p238 = scmp.lt.s32.totalorder %s17, 2
      // Predicated region
      $region37: #{tpu_custom_call.1} parent=5 // pred_check
        %p239 = pneg %p238
      $region38: #{tpu_custom_call.1} parent=5 // pred_check_branch
        %241 = sbr.rel (%p239) target = $region40
      $region39: #{tpu_custom_call.1} parent=5 // pred_region
        // Predicated region
        $region41: #{tpu_custom_call.1} parent=39 // pred_check
          %p242 = pneg %p37
        $region42: #{tpu_custom_call.1} parent=39 // pred_check_branch
          %244 = sbr.rel (%p242) target = $region44
        $region43: #{tpu_custom_call.1} parent=39 // pred_region
          %s245 = sand.u32 %s27, 1
          %s246 = scalar_lea.sflag [#allocation3], %s245
          %s247 = sand.u32 %s27, 1
          %s248 = smul.addr %s247, 8
          %s249 = scalar_lea.vmem [#allocation2], %s248
          %s251 = ssub.s32 128, 128
          %252 = vsyncadd %s246, %s251
          %s253 = smul.addr %s17, 128
          %s254 = scalar_lea.hbm %s0, %s253
          %s256 = sshll.u32 %s249, 4
          %s257 = int_to_ptr.vmem [resolvable:$true] %s256
          %259 = dma.hbm_to_vmem [thread:$0]  %s254, 128, %s257, %s246
        $region44: #{tpu_custom_call.1} parent=39 // pred_fallthru
          _
      $region40: #{tpu_custom_call.1} parent=5 // pred_fallthru
        _
      %p260 = scmp.le.s32.totalorder 1, %s17
      %p261 = scmp.lt.s32.totalorder %s17, 3
      %p262 = pnand %p260, %p261
      %p263 = pneg %p262
      // Predicated region
      $region45: #{tpu_custom_call.1} parent=5 // pred_check
        _
      $region46: #{tpu_custom_call.1} parent=5 // pred_check_branch
        %265 = sbr.rel (%p262) target = $region48
      $region47: #{tpu_custom_call.1} parent=5 // pred_region
        %s266 = ssub.s32 %s17, 1
        %s267 = sand.u32 %s30, 1
        %s268 = scalar_lea.sflag [#allocation3], %s267
        %s269 = sand.u32 %s30, 1
        %s270 = smul.addr %s269, 8
        %s271 = scalar_lea.vmem [#allocation2], %s270
        // Predicated region
        $region49: #{tpu_custom_call.1} parent=47 // pred_check
          %p272 = pneg %p43
        $region50: #{tpu_custom_call.1} parent=47 // pred_check_branch
          %274 = sbr.rel (%p272) target = $region52
        $region51: #{tpu_custom_call.1} parent=47 // pred_region
          %275 = dma.done %s268, 128
        $region52: #{tpu_custom_call.1} parent=47 // pred_fallthru
          _
        // Predicated region
        $region53: #{tpu_custom_call.1} parent=47 // pred_check
          %p276 = pneg %p64
        $region54: #{tpu_custom_call.1} parent=47 // pred_check_branch
          %278 = sbr.rel (%p276) target = $region56
        $region55: #{tpu_custom_call.1} parent=47 // pred_region
          %279 = dma.done [#allocation5], 512
        $region56: #{tpu_custom_call.1} parent=47 // pred_fallthru
          _
        %s280 = sand.u32 %s30, 1
        %s281 = scalar_lea.sflag [#allocation3], %s280
        %s282 = sand.u32 %s30, 1
        %s283 = smul.addr %s282, 8
        %s284 = scalar_lea.vmem [#allocation2], %s283
        %p285 = pneg %p43
        %p286 = pneg %p40
        %p287 = pneg %p64
        %p288 = pneg %p61
        %p289 = pneg %p85
        %p290 = pneg %p82
        %p291 = pneg %p106
        %p292 = pneg %p103
        %p293 = pneg %p127
        %p294 = pneg %p124
        %p295 = pneg %p148
        %p296 = pneg %p145
        %p297 = pneg %p169
        %p298 = pneg %p166
        %p299 = pneg %p195
        %p300 = pneg %p192
        %p301 = scmp.lt.s32.totalorder %s22, 1
        %s302 = scalar_select %p301, %s22, 1
        %s303 = smul.addr %s302, 8
        %s304 = scalar_lea.vmem %s7, %s303
        %p305 = scmp.lt.s32.totalorder %s22, 1
        %s306 = scalar_select %p305, %s22, 1
        %s307 = smul.addr %s306, 8
        %s308 = scalar_lea.vmem %s7, %s307
        %v309 = vld [vmem:[%s271] sm:$0xff]
        %v310 = vld [vmem:[#allocation4] sm:$0xff]
        %v311 = vld [vmem:[#allocation4 + $0x8] sm:$0xff]
        %v312 = vld [vmem:[#allocation4 + $0x10] sm:$0xff]
        %v313 = vld [vmem:[#allocation4 + $0x18] sm:$0xff]
        %v314 = vld [vmem:[%s2] sm:$0x1]
        %v316 = vlaneseq
        %v317 = vshrl.u32 %v316, 7
        %v318 = vsub.s32 0, %v317
        %v319 = vrot.slane %v314, %v318
        %vm321 = vcmask 261120
        %v323 = vsel %vm321, %v309, 0
        %325 = vmatprep.subr.mxu0 0.0
        %326 = vmatpush1.msra.mxu0 %v310
        %327 = vmatprep.subr.mxu0 0.0
        %328 = vmatpush1.msra.mxu0 %v311
        %329 = vmatprep.subr.mxu0 0.0
        %330 = vmatpush1.msra.mxu0 %v312
        %331 = vmatprep.subr.mxu0 0.0
        %332 = vmatpush1.msra.mxu0 %v313
        %333 = vmatprep.subr.mxu0 0.0
        %334 = vmatpush1.msra.mxu0 0.0
        %335 = vmatprep.subr.mxu0 0.0
        %336 = vmatpush1.msra.mxu0 0.0
        %337 = vmatprep.subr.mxu0 0.0
        %338 = vmatpush1.msra.mxu0 0.0
        %339 = vmatprep.subr.mxu0 0.0
        %340 = vmatpush1.msra.mxu0 0.0
        %341 = vmatprep.subr.mxu0 0.0
        %342 = vmatpush1.msra.mxu0 0.0
        %343 = vmatprep.subr.mxu0 0.0
        %344 = vmatpush1.msra.mxu0 0.0
        %345 = vmatprep.subr.mxu0 0.0
        %346 = vmatpush1.msra.mxu0 0.0
        %347 = vmatprep.subr.mxu0 0.0
        %348 = vmatpush1.msra.mxu0 0.0
        %349 = vmatprep.subr.mxu0 0.0
        %350 = vmatpush1.msra.mxu0 0.0
        %351 = vmatprep.subr.mxu0 0.0
        %352 = vmatpush1.msra.mxu0 0.0
        %353 = vmatprep.subr.mxu0 0.0
        %354 = vmatpush1.msra.mxu0 0.0
        %355 = vmatprep.subr.mxu0 0.0
        %356 = vmatpush1.msra.mxu0 0.0
        %357 = vmatprep.subr.mxu0 0.0
        %358 = vmatpush1.msra.mxu0 0.0
        %359 = vmatprep.subr.mxu0 0.0
        %360 = vmatpush1.msra.mxu0 0.0
        %361 = vmatprep.subr.mxu0 0.0
        %362 = vmatpush1.msra.mxu0 0.0
        %363 = vmatprep.subr.mxu0 0.0
        %364 = vmatpush1.msra.mxu0 0.0
        %365 = vmatprep.subr.mxu0 0.0
        %366 = vmatpush1.msra.mxu0 0.0
        %367 = vmatprep.subr.mxu0 0.0
        %368 = vmatpush1.msra.mxu0 0.0
        %369 = vmatprep.subr.mxu0 0.0
        %370 = vmatpush1.msra.mxu0 0.0
        %371 = vmatprep.subr.mxu0 0.0
        %372 = vmatpush1.msra.mxu0 0.0
        %373 = vmatprep.subr.mxu0 0.0
        %374 = vmatpush1.msra.mxu0 0.0
        %375 = vmatprep.subr.mxu0 0.0
        %376 = vmatpush1.msra.mxu0 0.0
        %377 = vmatprep.subr.mxu0 0.0
        %378 = vmatpush1.msra.mxu0 0.0
        %379 = vmatprep.subr.mxu0 0.0
        %380 = vmatpush1.msra.mxu0 0.0
        %381 = vmatprep.subr.mxu0 0.0
        %382 = vmatpush1.msra.mxu0 0.0
        %383 = vmatprep.subr.mxu0 0.0
        %384 = vmatpush1.msra.mxu0 0.0
        %385 = vmatprep.subr.mxu0 0.0
        %386 = vmatpush1.msra.mxu0 0.0
        %387 = vmatprep.subr.mxu0 0.0
        %388 = vmatpush1.msra.mxu0 0.0
        %389 = vmatprep.mubr.f32.mxu0 0.0
        %390 = vmatmul.mubr.f32.gmra.mrb[0].mxu0 %v323
        %v391 = vpop.f32.mrb[0].mxu0
        %v392 = vadd.f32 %v319, %v391
        %v393 = vpop.f32.mrb[0].mxu0
        %394 = vdwg.mxu0
        %v395 = vmax.f32 %v392, 0.0
        %v396 = vld [vmem:[%s3] sm:$0xff]
        %v397 = vld [vmem:[%s3 + $0x8] sm:$0xff]
        %v398 = vld [vmem:[%s3 + $0x10] sm:$0xff]
        %v399 = vld [vmem:[%s3 + $0x18] sm:$0xff]
        %v400 = vld [vmem:[%s3 + $0x20] sm:$0xff]
        %v401 = vld [vmem:[%s3 + $0x28] sm:$0xff]
        %v402 = vld [vmem:[%s3 + $0x30] sm:$0xff]
        %v403 = vld [vmem:[%s3 + $0x38] sm:$0xff]
        %v404 = vld [vmem:[%s3 + $0x40] sm:$0xff]
        %v405 = vld [vmem:[%s3 + $0x48] sm:$0xff]
        %v406 = vld [vmem:[%s3 + $0x50] sm:$0xff]
        %v407 = vld [vmem:[%s3 + $0x58] sm:$0xff]
        %v408 = vld [vmem:[%s3 + $0x60] sm:$0xff]
        %v409 = vld [vmem:[%s3 + $0x68] sm:$0xff]
        %v410 = vld [vmem:[%s3 + $0x70] sm:$0xff]
        %v411 = vld [vmem:[%s3 + $0x78] sm:$0xff]
        %v412 = vld [vmem:[%s4] sm:$0x1]
        %v414 = vlaneseq
        %v415 = vshrl.u32 %v414, 7
        %v416 = vsub.s32 0, %v415
        %v417 = vrot.slane %v412, %v416
        %419 = vmatprep.subr.mxu0 0.0
        %420 = vmatpush1.msra.mxu0 %v396
        %421 = vmatprep.subr.mxu0 0.0
        %422 = vmatpush1.msra.mxu0 %v397
        %423 = vmatprep.subr.mxu0 0.0
        %424 = vmatpush1.msra.mxu0 %v398
        %425 = vmatprep.subr.mxu0 0.0
        %426 = vmatpush1.msra.mxu0 %v399
        %427 = vmatprep.subr.mxu0 0.0
        %428 = vmatpush1.msra.mxu0 %v400
        %429 = vmatprep.subr.mxu0 0.0
        %430 = vmatpush1.msra.mxu0 %v401
        %431 = vmatprep.subr.mxu0 0.0
        %432 = vmatpush1.msra.mxu0 %v402
        %433 = vmatprep.subr.mxu0 0.0
        %434 = vmatpush1.msra.mxu0 %v403
        %435 = vmatprep.subr.mxu0 0.0
        %436 = vmatpush1.msra.mxu0 %v404
        %437 = vmatprep.subr.mxu0 0.0
        %438 = vmatpush1.msra.mxu0 %v405
        %439 = vmatprep.subr.mxu0 0.0
        %440 = vmatpush1.msra.mxu0 %v406
        %441 = vmatprep.subr.mxu0 0.0
        %442 = vmatpush1.msra.mxu0 %v407
        %443 = vmatprep.subr.mxu0 0.0
        %444 = vmatpush1.msra.mxu0 %v408
        %445 = vmatprep.subr.mxu0 0.0
        %446 = vmatpush1.msra.mxu0 %v409
        %447 = vmatprep.subr.mxu0 0.0
        %448 = vmatpush1.msra.mxu0 %v410
        %449 = vmatprep.subr.mxu0 0.0
        %450 = vmatpush1.msra.mxu0 %v411
        %451 = vmatprep.subr.mxu0 0.0
        %452 = vmatpush1.msra.mxu0 0.0
        %453 = vmatprep.subr.mxu0 0.0
        %454 = vmatpush1.msra.mxu0 0.0
        %455 = vmatprep.subr.mxu0 0.0
        %456 = vmatpush1.msra.mxu0 0.0
        %457 = vmatprep.subr.mxu0 0.0
        %458 = vmatpush1.msra.mxu0 0.0
        %459 = vmatprep.subr.mxu0 0.0
        %460 = vmatpush1.msra.mxu0 0.0
        %461 = vmatprep.subr.mxu0 0.0
        %462 = vmatpush1.msra.mxu0 0.0
        %463 = vmatprep.subr.mxu0 0.0
        %464 = vmatpush1.msra.mxu0 0.0
        %465 = vmatprep.subr.mxu0 0.0
        %466 = vmatpush1.msra.mxu0 0.0
        %467 = vmatprep.subr.mxu0 0.0
        %468 = vmatpush1.msra.mxu0 0.0
        %469 = vmatprep.subr.mxu0 0.0
        %470 = vmatpush1.msra.mxu0 0.0
        %471 = vmatprep.subr.mxu0 0.0
        %472 = vmatpush1.msra.mxu0 0.0
        %473 = vmatprep.subr.mxu0 0.0
        %474 = vmatpush1.msra.mxu0 0.0
        %475 = vmatprep.subr.mxu0 0.0
        %476 = vmatpush1.msra.mxu0 0.0
        %477 = vmatprep.subr.mxu0 0.0
        %478 = vmatpush1.msra.mxu0 0.0
        %479 = vmatprep.subr.mxu0 0.0
        %480 = vmatpush1.msra.mxu0 0.0
        %481 = vmatprep.subr.mxu0 0.0
        %482 = vmatpush1.msra.mxu0 0.0
        %483 = vmatprep.mubr.f32.mxu0 0.0
        %484 = vmatmul.mubr.f32.gmra.mrb[0].mxu0 %v395
        %v485 = vpop.f32.mrb[0].mxu0
        %v486 = vadd.f32 %v417, %v485
        %v487 = vpop.f32.mrb[0].mxu0
        %488 = vdwg.mxu0
        %v489 = vmax.f32 %v486, 0.0
        %v490 = vld [vmem:[%s5] sm:$0xff]
        %v491 = vld [vmem:[%s5 + $0x8] sm:$0xff]
        %v492 = vld [vmem:[%s5 + $0x10] sm:$0xff]
        %v493 = vld [vmem:[%s5 + $0x18] sm:$0xff]
        %v494 = vld [vmem:[%s5 + $0x20] sm:$0xff]
        %v495 = vld [vmem:[%s5 + $0x28] sm:$0xff]
        %v496 = vld [vmem:[%s5 + $0x30] sm:$0xff]
        %v497 = vld [vmem:[%s5 + $0x38] sm:$0xff]
        %v498 = vld [vmem:[%s5 + $0x40] sm:$0xff]
        %v499 = vld [vmem:[%s5 + $0x48] sm:$0xff]
        %v500 = vld [vmem:[%s5 + $0x50] sm:$0xff]
        %v501 = vld [vmem:[%s5 + $0x58] sm:$0xff]
        %v502 = vld [vmem:[%s5 + $0x60] sm:$0xff]
        %v503 = vld [vmem:[%s5 + $0x68] sm:$0xff]
        %v504 = vld [vmem:[%s5 + $0x70] sm:$0xff]
        %v505 = vld [vmem:[%s5 + $0x78] sm:$0xff]
        %v506 = vld [vmem:[%s6] sm:$0x1]
        %v508 = vlaneseq
        %v509 = vshrl.u32 %v508, 7
        %v510 = vsub.s32 0, %v509
        %v511 = vrot.slane %v506, %v510
        %513 = vmatprep.subr.mxu0 0.0
        %514 = vmatpush1.msra.mxu0 %v490
        %515 = vmatprep.subr.mxu0 0.0
        %516 = vmatpush1.msra.mxu0 %v491
        %517 = vmatprep.subr.mxu0 0.0
        %518 = vmatpush1.msra.mxu0 %v492
        %519 = vmatprep.subr.mxu0 0.0
        %520 = vmatpush1.msra.mxu0 %v493
        %521 = vmatprep.subr.mxu0 0.0
        %522 = vmatpush1.msra.mxu0 %v494
        %523 = vmatprep.subr.mxu0 0.0
        %524 = vmatpush1.msra.mxu0 %v495
        %525 = vmatprep.subr.mxu0 0.0
        %526 = vmatpush1.msra.mxu0 %v496
        %527 = vmatprep.subr.mxu0 0.0
        %528 = vmatpush1.msra.mxu0 %v497
        %529 = vmatprep.subr.mxu0 0.0
        %530 = vmatpush1.msra.mxu0 %v498
        %531 = vmatprep.subr.mxu0 0.0
        %532 = vmatpush1.msra.mxu0 %v499
        %533 = vmatprep.subr.mxu0 0.0
        %534 = vmatpush1.msra.mxu0 %v500
        %535 = vmatprep.subr.mxu0 0.0
        %536 = vmatpush1.msra.mxu0 %v501
        %537 = vmatprep.subr.mxu0 0.0
        %538 = vmatpush1.msra.mxu0 %v502
        %539 = vmatprep.subr.mxu0 0.0
        %540 = vmatpush1.msra.mxu0 %v503
        %541 = vmatprep.subr.mxu0 0.0
        %542 = vmatpush1.msra.mxu0 %v504
        %543 = vmatprep.subr.mxu0 0.0
        %544 = vmatpush1.msra.mxu0 %v505
        %545 = vmatprep.subr.mxu0 0.0
        %546 = vmatpush1.msra.mxu0 0.0
        %547 = vmatprep.subr.mxu0 0.0
        %548 = vmatpush1.msra.mxu0 0.0
        %549 = vmatprep.subr.mxu0 0.0
        %550 = vmatpush1.msra.mxu0 0.0
        %551 = vmatprep.subr.mxu0 0.0
        %552 = vmatpush1.msra.mxu0 0.0
        %553 = vmatprep.subr.mxu0 0.0
        %554 = vmatpush1.msra.mxu0 0.0
        %555 = vmatprep.subr.mxu0 0.0
        %556 = vmatpush1.msra.mxu0 0.0
        %557 = vmatprep.subr.mxu0 0.0
        %558 = vmatpush1.msra.mxu0 0.0
        %559 = vmatprep.subr.mxu0 0.0
        %560 = vmatpush1.msra.mxu0 0.0
        %561 = vmatprep.subr.mxu0 0.0
        %562 = vmatpush1.msra.mxu0 0.0
        %563 = vmatprep.subr.mxu0 0.0
        %564 = vmatpush1.msra.mxu0 0.0
        %565 = vmatprep.subr.mxu0 0.0
        %566 = vmatpush1.msra.mxu0 0.0
        %567 = vmatprep.subr.mxu0 0.0
        %568 = vmatpush1.msra.mxu0 0.0
        %569 = vmatprep.subr.mxu0 0.0
        %570 = vmatpush1.msra.mxu0 0.0
        %571 = vmatprep.subr.mxu0 0.0
        %572 = vmatpush1.msra.mxu0 0.0
        %573 = vmatprep.subr.mxu0 0.0
        %574 = vmatpush1.msra.mxu0 0.0
        %575 = vmatprep.subr.mxu0 0.0
        %576 = vmatpush1.msra.mxu0 0.0
        %577 = vmatprep.mubr.f32.mxu0 0.0
        %578 = vmatmul.mubr.f32.gmra.mrb[0].mxu0 %v489
        %v579 = vpop.f32.mrb[0].mxu0
        %v580 = vadd.f32 %v511, %v579
        %v581 = vpop.f32.mrb[0].mxu0
        %582 = vdwg.mxu0
        %v583 = vmul.f32 %v580, 0.5
        %v584 = vtanh.pop %v583
        %v585 = vmul.f32 %v584, 0.5
        %v586 = vadd.f32 %v585, 0.5
        %vm587 = vcmask 31744
        %588 = vst.msk [vmem:[%s308] sm:$0xff] %vm587, %v586
        %p589 = scmp.lt.s32.totalorder %s22, 1
        %s590 = scalar_select %p589, %s22, 1
        %s591 = smul.addr %s590, 8
        %s592 = scalar_lea.vmem %s7, %s591
        // Predicated region
        $region57: #{tpu_custom_call.1} parent=47 // pred_check
          %p593 = pneg %p192
        $region58: #{tpu_custom_call.1} parent=47 // pred_check_branch
          %595 = sbr.rel (%p593) target = $region60
        $region59: #{tpu_custom_call.1} parent=47 // pred_region
          _
        $region60: #{tpu_custom_call.1} parent=47 // pred_fallthru
          _
      $region48: #{tpu_custom_call.1} parent=5 // pred_fallthru
        _
      %p596 = scmp.le.s32.totalorder 2, %s17
      // Predicated region
      $region61: #{tpu_custom_call.1} parent=5 // pred_check
        %p597 = pneg %p596
      $region62: #{tpu_custom_call.1} parent=5 // pred_check_branch
        %599 = sbr.rel (%p597) target = $region64
      $region63: #{tpu_custom_call.1} parent=5 // pred_region
        %s600 = ssub.s32 %s17, 2
        // Predicated region
        $region65: #{tpu_custom_call.1} parent=63 // pred_check
          %p601 = pneg %p198
        $region66: #{tpu_custom_call.1} parent=63 // pred_check_branch
          %603 = sbr.rel (%p601) target = $region68
        $region67: #{tpu_custom_call.1} parent=63 // pred_region
          %p604 = scmp.lt.s32.totalorder %s23, 1
          %s605 = scalar_select %p604, %s23, 1
          %s606 = smul.addr %s605, 8
          %s607 = scalar_lea.vmem %s7, %s606
        $region68: #{tpu_custom_call.1} parent=63 // pred_fallthru
          _
      $region64: #{tpu_custom_call.1} parent=5 // pred_fallthru
        _
    $region6: #{tpu_custom_call.1} parent=1 // loop_footer
      %s21 = sadd.s32 1, %s17
    $region7: #{tpu_custom_call.1} parent=1 // loop_footer_branch
      %16 = sbr.rel target = $region3
    $region8: #{tpu_custom_call.1} parent=1 // loop_exit
      _
    %608 = vsyncpa [#allocation3], 1
    %s609 = scalar_lea.sflag [#allocation3], 1
    %610 = vsyncpa %s609, 1
    %611 = vsyncpa [#allocation5], 1

</llo_original>
